<compile_context>
chip_gen: v6e
topology: v6e:2x2x1
jax: 0.10.0
libtpu: 0.0.40
codegen_flags: <defaults>
</compile_context>

<pallas_src>
import jax
import jax.numpy as jnp
from jax.experimental import pallas as pl
from jax.experimental.pallas import tpu as pltpu

_LANES = 128


def _round_up(x, m):
    return ((x + m - 1) // m) * m


def _atloc_partial_kernel(pred_ref, targ_ref, out_ref, acc_ref):
    """Accumulate |pred - targ| over row-blocks; emit per-lane partial sums."""
    k = pl.program_id(1)

    @pl.when(k == 0)
    def _init():
        acc_ref[...] = jnp.zeros_like(acc_ref)

    # abs-diff in f32 (accumulator dtype); plain VALU adds in the hot loop.
    diff = jnp.abs(pred_ref[...].astype(jnp.float32)
                   - targ_ref[...].astype(jnp.float32))
    acc_ref[...] += diff

    @pl.when(k == pl.num_programs(1) - 1)
    def _finalize():
        # Single cross-sublane (XLU) reduce per shard -> lane-dense (1, 128).
        out_ref[...] = jnp.sum(acc_ref[...], axis=0, keepdims=True)


def atloc_criterion(pred, targ, sax, saq, *, max_block_rows=512):
    """Pallas implementation of AtLocCriterion.forward.

    pred, targ: [N, D] float arrays (D >= 4; cols 0..2 translation, 3.. quat).
    sax, saq:   scalar (or shape-(1,)) parameters.
    Returns a scalar float32 loss.
    """
    n, d = pred.shape
    if d < 4:
        raise ValueError("need at least 3 translation + 1 quaternion column")

    # Pad the pose dim to a power-of-two divisor of 128 so one 128-lane row
    # holds a whole number of poses and the column mask is a fixed lane
    # pattern (lane % d_pad).
    d_pad = 8
    while d_pad < d:
        d_pad *= 2
    if d_pad > _LANES:
        raise ValueError("pose dimension too large for this layout")
    poses_per_row = _LANES // d_pad

    rows = -(-n // poses_per_row)                               # ceil div
    block_rows = min(_round_up(max_block_rows, 8), _round_up(rows, 8))
    steps_total = -(-rows // block_rows)
    num_shards = 2 if steps_total >= 2 else 1                   # megacore split
    steps = -(-steps_total // num_shards)
    rows_pad = num_shards * steps * block_rows
    n_pad = rows_pad * poses_per_row

    def to_slab(x):
        # Zero-pad both N and D (identical padding in pred/targ => diff == 0),
        # then present a sublane+lane-dense (rows_pad, 128) slab (row-major,
        # so the reshape itself is free).
        x = jnp.pad(x, ((0, n_pad - n), (0, d_pad - d)))
        return x.reshape(rows_pad, _LANES)

    pred_slab = to_slab(pred)
    targ_slab = to_slab(targ)

    partials = pl.pallas_call(
        _atloc_partial_kernel,
        out_shape=jax.ShapeDtypeStruct((num_shards, _LANES), jnp.float32),
        grid_spec=pltpu.PrefetchScalarGridSpec(
            num_scalar_prefetch=0,
            grid=(num_shards, steps),
            in_specs=[
                pl.BlockSpec((block_rows, _LANES),
                             lambda s, k: (s * steps + k, 0)),
                pl.BlockSpec((block_rows, _LANES),
                             lambda s, k: (s * steps + k, 0)),
            ],
            out_specs=pl.BlockSpec((1, _LANES), lambda s, k: (s, 0)),
            scratch_shapes=[pltpu.VMEM((block_rows, _LANES), jnp.float32)],
        ),
        compiler_params=pltpu.CompilerParams(
            dimension_semantics=("parallel", "arbitrary")),
    )(pred_slab, targ_slab)

    # Trivial final combine in the wrapper (fused by XLA): masked lane reduce,
    # L1 means with the TRUE n/d divisors, and the exp/add scalar epilogue.
    lane_sums = jnp.sum(partials, axis=0)                       # (128,)
    col = jnp.arange(_LANES, dtype=jnp.int32) % d_pad
    t_sum = jnp.sum(jnp.where(col < 3, lane_sums, 0.0))
    q_sum = jnp.sum(jnp.where((col >= 3) & (col < d), lane_sums, 0.0))
    t_loss = t_sum / jnp.float32(n * 3)
    q_loss = q_sum / jnp.float32(n * (d - 3))

    sax_s = jnp.asarray(sax, jnp.float32).reshape(-1)[0]
    saq_s = jnp.asarray(saq, jnp.float32).reshape(-1)[0]
    return (jnp.exp(-sax_s) * t_loss + sax_s
            + jnp.exp(-saq_s) * q_loss + saq_s)


def _reference_loss(pred, targ, sax, saq):
    t_loss = jnp.mean(jnp.abs(pred[:, :3] - targ[:, :3]))
    q_loss = jnp.mean(jnp.abs(pred[:, 3:] - targ[:, 3:]))
    s0, s1 = sax.reshape(-1)[0], saq.reshape(-1)[0]
    return jnp.exp(-s0) * t_loss + s0 + jnp.exp(-s1) * q_loss + s1


if __name__ == "__main__":
    key = jax.random.PRNGKey(0)
    k1, k2, k3, k4 = jax.random.split(key, 4)

    # Module parameters (typical AtLoc values sax=0.0, saq=-3.0).
    sax = jnp.array([0.0], dtype=jnp.float32)
    saq = jnp.array([-3.0], dtype=jnp.float32)

    # Check 1: AtLoc-style pose vectors, tiny batch (single grid step).
    N, D = 8, 7
    pred = jax.random.normal(k1, (N, D), dtype=jnp.float32)
    targ = jax.random.normal(k2, (N, D), dtype=jnp.float32)
    loss = jax.block_until_ready(atloc_criterion(pred, targ, sax, saq))
    ref = _reference_loss(pred, targ, sax, saq)
    assert jnp.allclose(loss, ref, rtol=1e-5, atol=1e-5), (loss, ref)

    # Check 2: larger batch with a small block size to exercise the gridded
    # accumulator pipeline, the 2-shard ("parallel") axis and N/D padding.
    N2, D2 = 300, 7
    pred2 = jax.random.normal(k3, (N2, D2), dtype=jnp.float32)
    targ2 = jax.random.normal(k4, (N2, D2), dtype=jnp.float32)
    loss2 = jax.block_until_ready(
        atloc_criterion(pred2, targ2, sax, saq, max_block_rows=8))
    ref2 = _reference_loss(pred2, targ2, sax, saq)
    assert jnp.allclose(loss2, ref2, rtol=1e-5, atol=1e-5), (loss2, ref2)

    print("KERNEL_OK")
</pallas_src>

<mosaic_0001>
module attributes {stable_mosaic.version = 11 : i64} {
  func.func @_atloc_partial_kernel(%arg0: i32, %arg1: i32, %arg2: memref<8x128xf32, #tpu.memory_space<vmem>>, %arg3: memref<8x128xf32, #tpu.memory_space<vmem>>, %arg4: memref<1x128xf32, #tpu.memory_space<vmem>>, %arg5: memref<8x128xf32, #tpu.memory_space<vmem>>) attributes {dimension_semantics = [#tpu.dimension_semantics<parallel>, #tpu.dimension_semantics<arbitrary>], iteration_bounds = array<i64: 1, 1>, scalar_prefetch = 0 : i64, scratch_operands = 1 : i64, tpu.core_type = #tpu.core_type<tc>, window_params = [{transform_indices = @transform_0, window_bounds = array<i64: 8, 128>}, {transform_indices = @transform_1, window_bounds = array<i64: 8, 128>}, {transform_indices = @transform_2, window_bounds = array<i64: 1, 128>}]} {
    %c0_i32 = arith.constant 0 : i32
    %0 = arith.cmpi eq, %arg1, %c0_i32 : i32
    %1 = arith.extui %0 : i1 to i32
    %c0_i32_0 = arith.constant 0 : i32
    %2 = arith.cmpi ne, %1, %c0_i32_0 : i32
    scf.if %2 {
      %cst = arith.constant 0.000000e+00 : f32
      %13 = vector.broadcast %cst : f32 to vector<8x128xf32>
      %c0_10 = arith.constant 0 : index
      %c0_11 = arith.constant 0 : index
      %14 = vector.load %arg5[%c0_10, %c0_11] : memref<8x128xf32, #tpu.memory_space<vmem>>, vector<8x128xf32>
      tpu.vector_store %arg5[%c0_10, %c0_11], %13 {strides = array<i32>} : memref<8x128xf32, #tpu.memory_space<vmem>>, vector<8x128xf32>,
    } else {
    }
    %c0 = arith.constant 0 : index
    %c0_1 = arith.constant 0 : index
    %3 = vector.load %arg2[%c0, %c0_1] : memref<8x128xf32, #tpu.memory_space<vmem>>, vector<8x128xf32>
    %c0_2 = arith.constant 0 : index
    %c0_3 = arith.constant 0 : index
    %4 = vector.load %arg3[%c0_2, %c0_3] : memref<8x128xf32, #tpu.memory_space<vmem>>, vector<8x128xf32>
    %5 = arith.subf %3, %4 : vector<8x128xf32>
    %6 = math.absf %5 : vector<8x128xf32>
    %c0_4 = arith.constant 0 : index
    %c0_5 = arith.constant 0 : index
    %7 = vector.load %arg5[%c0_4, %c0_5] : memref<8x128xf32, #tpu.memory_space<vmem>>, vector<8x128xf32>
    %8 = arith.addf %7, %6 : vector<8x128xf32>
    %c0_6 = arith.constant 0 : index
    %c0_7 = arith.constant 0 : index
    %9 = vector.load %arg5[%c0_6, %c0_7] : memref<8x128xf32, #tpu.memory_space<vmem>>, vector<8x128xf32>
    tpu.vector_store %arg5[%c0_6, %c0_7], %8 {strides = array<i32>} : memref<8x128xf32, #tpu.memory_space<vmem>>, vector<8x128xf32>,
    %c0_i32_8 = arith.constant 0 : i32
    %10 = arith.cmpi eq, %arg1, %c0_i32_8 : i32
    %11 = arith.extui %10 : i1 to i32
    %c0_i32_9 = arith.constant 0 : i32
    %12 = arith.cmpi ne, %11, %c0_i32_9 : i32
    scf.if %12 {
      %c0_10 = arith.constant 0 : index
      %c0_11 = arith.constant 0 : index
      %13 = vector.load %arg5[%c0_10, %c0_11] : memref<8x128xf32, #tpu.memory_space<vmem>>, vector<8x128xf32>
      %cst = arith.constant dense<0.000000e+00> : vector<128xf32>
      %14 = vector.multi_reduction <add>, %13, %cst [0] : vector<8x128xf32> to vector<128xf32>
      %15 = vector.shape_cast %14 : vector<128xf32> to vector<1x128xf32>
      %c0_12 = arith.constant 0 : index
      %c0_13 = arith.constant 0 : index
      %16 = vector.load %arg4[%c0_12, %c0_13] : memref<1x128xf32, #tpu.memory_space<vmem>>, vector<1x128xf32>
      tpu.vector_store %arg4[%c0_12, %c0_13], %15 {strides = array<i32>} : memref<1x128xf32, #tpu.memory_space<vmem>>, vector<1x128xf32>,
    } else {
    }
    return
  }
  func.func @transform_0(%arg0: i32, %arg1: i32) -> (i32, i32) {
    %c1_i32 = arith.constant 1 : i32
    %0 = arith.muli %arg0, %c1_i32 : i32
    %1 = arith.addi %0, %arg1 : i32
    %c0_i32 = arith.constant 0 : i32
    %c0_i32_0 = arith.constant 0 : i32
    return %1, %c0_i32 : i32, i32
  }
  func.func @transform_1(%arg0: i32, %arg1: i32) -> (i32, i32) {
    %c1_i32 = arith.constant 1 : i32
    %0 = arith.muli %arg0, %c1_i32 : i32
    %1 = arith.addi %0, %arg1 : i32
    %c0_i32 = arith.constant 0 : i32
    %c0_i32_0 = arith.constant 0 : i32
    return %1, %c0_i32 : i32, i32
  }
  func.func @transform_2(%arg0: i32, %arg1: i32) -> (i32, i32) {
    %c0_i32 = arith.constant 0 : i32
    %c0_i32_0 = arith.constant 0 : i32
    return %arg0, %c0_i32 : i32, i32
  }
}

</mosaic_0001>

<llo_original>
// kernel: tpu_custom_call.1
$region0: #{tpu_custom_call.1}
  #allocation0 [shape = 'u32[]', space=smem, size = 0x4, offset = 0x4, fixed_abs, tag = 'smem constant byte address 0x4 - core index']
  #allocation1 [shape = 'u32[144,128]{1,0:T(1,128)}', space=vmem, size = 0x12000, scoped, tag = 'internal scratch']
  #allocation2 [shape = 'f32[8,128]{1,0:T(8,128)}', space=vmem, size = 0x1000, scoped, tag = 'scratch operand']
  %s0 = inlined_call_operand.hbm [shape: f32[8,128], index: 0, kind: input, shape index: {}]
  %s1 = inlined_call_operand.hbm [shape: f32[8,128], index: 1, kind: input, shape index: {}]
  %s2 = inlined_call_operand.hbm [shape: f32[1,128], index: 2, kind: output, shape index: {}]
  %s3 = sld [smem:[#allocation0]]
  $region34: #{tpu_custom_call.1} parent=0
    _
  %s5 = ssub.s32 1, %s3
  %s6 = scalar_select 0, %s5, %s3
  $region1: #{tpu_custom_call.1} parent=0
    #allocation3 [shape = 'u8[4096]{0}', space=vmem, size = 0x1000, scoped, tag = 'input window, operand 0, single buffered']
    #allocation4 [shape = 's32[1]{0}', space=sflag, size = 0x4, scoped, tag = 'scoped memory for tpu_custom_call.1']
    #allocation5 [shape = 's32[1]{0}', space=sflag, size = 0x4, scoped, tag = 'scoped memory for tpu_custom_call.1']
    #allocation6 [shape = 'u8[4096]{0}', space=vmem, size = 0x1000, scoped, tag = 'input window, operand 1, single buffered']
    #allocation7 [shape = 's32[1]{0}', space=sflag, size = 0x4, scoped, tag = 'scoped memory for tpu_custom_call.1']
    #allocation8 [shape = 'u8[512]{0}', space=vmem, size = 0x400, scoped, tag = 'output window, operand 0, single buffered']
    %7 = vsyncpa [#allocation4], 0
    %8 = vsyncpa [#allocation7], 0
    %9 = vsyncpa [#allocation5], 0
    // Predicated region
    $region2: #{tpu_custom_call.1} parent=1 // pred_check
      _
    $region3: #{tpu_custom_call.1} parent=1 // pred_check_branch
      %11 = sbr.rel (0) target = $region5
    $region4: #{tpu_custom_call.1} parent=1 // pred_region
      %s12 = sadd.s32 0, 0
      %s14 = ssub.s32 128, 128
      %15 = vsyncadd [#allocation4], %s14
      %s16 = smul.addr %s12, 128
      %s17 = scalar_lea.hbm %s0, %s16
      %s19 = sshll.u32 [#allocation3], 4
      %s20 = int_to_ptr.vmem [resolvable:$true] %s19
      %22 = dma.hbm_to_vmem [thread:$0]  %s17, 128, %s20, [#allocation4]
    $region5: #{tpu_custom_call.1} parent=1 // pred_fallthru
      _
    // Predicated region
    $region6: #{tpu_custom_call.1} parent=1 // pred_check
      _
    $region7: #{tpu_custom_call.1} parent=1 // pred_check_branch
      %24 = sbr.rel (0) target = $region9
    $region8: #{tpu_custom_call.1} parent=1 // pred_region
      %s25 = sadd.s32 0, 0
      %s27 = ssub.s32 128, 128
      %28 = vsyncadd [#allocation7], %s27
      %s29 = smul.addr %s25, 128
      %s30 = scalar_lea.hbm %s1, %s29
      %s32 = sshll.u32 [#allocation6], 4
      %s33 = int_to_ptr.vmem [resolvable:$true] %s32
      %35 = dma.hbm_to_vmem [thread:$0]  %s30, 128, %s33, [#allocation7]
    $region9: #{tpu_custom_call.1} parent=1 // pred_fallthru
      _
    // Predicated region
    $region10: #{tpu_custom_call.1} parent=1 // pred_check
      _
    $region11: #{tpu_custom_call.1} parent=1 // pred_check_branch
      %37 = sbr.rel (0) target = $region13
    $region12: #{tpu_custom_call.1} parent=1 // pred_region
      %38 = dma.done [#allocation4], 128
    $region13: #{tpu_custom_call.1} parent=1 // pred_fallthru
      _
    // Predicated region
    $region14: #{tpu_custom_call.1} parent=1 // pred_check
      _
    $region15: #{tpu_custom_call.1} parent=1 // pred_check_branch
      %40 = sbr.rel (0) target = $region17
    $region16: #{tpu_custom_call.1} parent=1 // pred_region
      %41 = dma.done [#allocation7], 128
    $region17: #{tpu_custom_call.1} parent=1 // pred_fallthru
      _
    %s42 = sadd.s32 0, 0
    %s43 = sadd.s32 0, 0
    %p44 = scmp.eq.s32.totalorder 0, 0
    // Predicated region
    $region18: #{tpu_custom_call.1} parent=1 // pred_check
      %p45 = pneg %p44
    $region19: #{tpu_custom_call.1} parent=1 // pred_check_branch
      %47 = sbr.rel (%p45) target = $region21
    $region20: #{tpu_custom_call.1} parent=1 // pred_region
      %48 = vst [vmem:[#allocation2] sm:$0xff] 0.0
    $region21: #{tpu_custom_call.1} parent=1 // pred_fallthru
      _
    %v49 = vld [vmem:[#allocation3] sm:$0xff]
    %v50 = vld [vmem:[#allocation6] sm:$0xff]
    %v51 = vsub.f32 %v49, %v50
    %v52 = vand.u32 2147483647, %v51
    %v53 = vld [vmem:[#allocation2] sm:$0xff]
    %v54 = vadd.f32 %v53, %v52
    %55 = vst [vmem:[#allocation2] sm:$0xff] %v54
    // Predicated region
    $region22: #{tpu_custom_call.1} parent=1 // pred_check
      %p56 = pneg %p44
    $region23: #{tpu_custom_call.1} parent=1 // pred_check_branch
      %58 = sbr.rel (%p56) target = $region25
    $region24: #{tpu_custom_call.1} parent=1 // pred_region
      %v59 = vld [vmem:[#allocation2] sm:$0xff]
      %v60 = vrot.slane %v59, 4
      %v61 = vadd.f32 %v59, %v60
      %v62 = vrot.slane %v61, 2
      %v63 = vadd.f32 %v61, %v62
      %v64 = vrot.slane %v63, 1
      %v65 = vadd.f32 %v63, %v64
      %66 = vst [vmem:[#allocation8] sm:$0x1] %v65
    $region25: #{tpu_custom_call.1} parent=1 // pred_fallthru
      _
    // Predicated region
    $region26: #{tpu_custom_call.1} parent=1 // pred_check
      _
    $region27: #{tpu_custom_call.1} parent=1 // pred_check_branch
      %68 = sbr.rel (0) target = $region29
    $region28: #{tpu_custom_call.1} parent=1 // pred_region
      %s70 = ssub.s32 16, 16
      %71 = vsyncadd [#allocation5], %s70
      %s73 = sshll.u32 [#allocation8], 4
      %s74 = int_to_ptr.vmem [resolvable:$true] %s73
      %76 = dma.vmem_to_hbm [thread:$0]  %s74, 16, %s2, [#allocation5]
    $region29: #{tpu_custom_call.1} parent=1 // pred_fallthru
      _
    // Predicated region
    $region30: #{tpu_custom_call.1} parent=1 // pred_check
      _
    $region31: #{tpu_custom_call.1} parent=1 // pred_check_branch
      %78 = sbr.rel (0) target = $region33
    $region32: #{tpu_custom_call.1} parent=1 // pred_region
      %79 = dma.done [#allocation5], 16
    $region33: #{tpu_custom_call.1} parent=1 // pred_fallthru
      _
    %80 = vsyncpa [#allocation4], 1
    %81 = vsyncpa [#allocation7], 1
    %82 = vsyncpa [#allocation5], 1

</llo_original>
